<compile_context>
chip_gen: v7x
topology: tpu7x:2x2x1
jax: 0.10.0
libtpu: 0.0.40
codegen_flags: <defaults>
</compile_context>

<pallas_src>
import jax
import jax.numpy as jnp
from jax.experimental import pallas as pl
from jax.experimental.pallas import tpu as pltpu


def head_kernel(x_ref, w1_ref, b1_ref, w2_ref, b2_ref, o_ref):
    """x: (Bt, C, HW) VMEM; w1: (1, C, 1) VMEM; b1: (1, 1) SMEM scalar;
    w2: (HW, O) VMEM; b2: (1, O) VMEM; o: (Bt, O) VMEM."""
    x = x_ref[...].astype(jnp.float32)      # f32 accumulate (no-op for f32 input)
    w1 = w1_ref[...]                        # (1, C, 1): C on sublanes -> broadcasts
                                            # against x with no in-kernel relayout
    b1 = b1_ref[0, 0]                       # scalar conv bias (SMEM)

    # 1x1 conv over channels: VPU multiply + channel (sublane) reduce.
    # ~C/8 vreg mul+adds per (batch row, lane tile); no degenerate M=1 MXU
    # matmuls, no MRF/MRB pop latency, MXU stays free.
    h = jnp.maximum(jnp.sum(x * w1, axis=1) + b1, 0.0)          # (Bt, HW)

    # fc for the whole tile: (Bt, HW) @ (HW, O) -> (Bt, O). One tiny MXU pass;
    # with O=16 this is a non-lever (binding resource is DMA/launch overhead).
    out = jnp.dot(h, w2_ref[...], preferred_element_type=jnp.float32)
    o_ref[...] = (out + b2_ref[...]).astype(o_ref.dtype)        # single store


def prepare_params(conv_w, conv_b, fc_w, fc_b):
    """One-time parameter prep, hoisted out of the hot call (fc_w.T etc. are
    otherwise un-hidden XLA ops on every invocation).

    conv_w: (1, C, 1, 1), conv_b: (1,), fc_w: (O, HW), fc_b: (O,).
    """
    C = conv_w.shape[1]
    O, _ = fc_w.shape
    # (1, C, 1): C lands on the sublane axis, matching x's (Bt, C, HW) layout,
    # so the kernel multiply is a pure lane-splat broadcast.  (Costs C*128*4 B
    # of VMEM -- ~0.7 MiB at the module-default C=1408 -- vs ~45 KiB for a
    # (1, C) layout + per-step relayout; negligible against the x tile.)
    w1 = jnp.asarray(conv_w, jnp.float32).reshape(1, C, 1)
    b1 = jnp.asarray(conv_b, jnp.float32).reshape(1, 1)          # scalar -> SMEM
    w2 = jnp.asarray(fc_w, jnp.float32).T                        # (HW, O), ONCE
    b2 = jnp.asarray(fc_b, jnp.float32).reshape(1, O)
    return w1, b1, w2, b2


def _derive_block_b(batch, channels, hw, *, vmem_budget_bytes=12 * 1024 * 1024,
                    bytes_per_elem=4):
    """Batch tile for the gridded path.

    Budgeted against the lane-PADDED spatial width (vregs are 128 lanes wide,
    so HW=100 occupies 128 lanes -> ~22% padding), with x double-buffered and
    headroom left for weights / h / the f32 fc inputs.  The 12 MiB default
    fits v5e's 16 MiB scoped VMEM; v7x (32 MiB scoped / 64 MiB physical) can
    take ~24 MiB; v6e can go much larger together with vmem_limit_bytes so
    each step reads >=1-2 MiB of x (~85%+ of HBM roofline).
    """
    hw_padded = pl.cdiv(hw, 128) * 128
    per_row = 2 * channels * hw_padded * bytes_per_elem          # double-buffered x
    bt = max(1, int(vmem_budget_bytes // per_row))
    if bt >= batch:
        return batch
    return max(8, (bt // 8) * 8)          # keep the (Bt, O) store sublane-aligned


def jigsaw_head(x_nchw, params, *, block_b=None, vmem_limit_bytes=None,
                vmem_budget_bytes=12 * 1024 * 1024):
    """conv1x1 -> ReLU -> fc head.  params = prepare_params(...)."""
    w1, b1, w2, b2 = params
    B, C, H, W = x_nchw.shape
    HW = H * W
    O = w2.shape[1]
    assert HW == w2.shape[0], "fc expects flatten(1) of the (B,1,H,W) conv output"

    # NCHW-native glue: reshape only (pixel index p = h*W + w == flatten(1)
    # order), no HBM transpose pass.
    x = x_nchw.reshape(B, C, HW)

    if block_b is None:
        block_b = _derive_block_b(B, C, HW, vmem_budget_bytes=vmem_budget_bytes)

    out_shape = jax.ShapeDtypeStruct((B, O), jnp.float32)

    if block_b >= B:
        # Tiny batch: single invocation, no grid -> no pointless double
        # buffering, no ~0.35 us/step grid overhead.
        return pl.pallas_call(
            head_kernel,
            out_shape=out_shape,
            in_specs=[
                pl.BlockSpec(memory_space=pltpu.MemorySpace.VMEM),   # x
                pl.BlockSpec(memory_space=pltpu.MemorySpace.VMEM),   # w1
                pl.BlockSpec(memory_space=pltpu.MemorySpace.SMEM),   # b1 (scalar)
                pl.BlockSpec(memory_space=pltpu.MemorySpace.VMEM),   # w2
                pl.BlockSpec(memory_space=pltpu.MemorySpace.VMEM),   # b2
            ],
            out_specs=pl.BlockSpec(memory_space=pltpu.MemorySpace.VMEM),
        )(x, w1, b1, w2, b2)

    # Scaled path: grid over the batch.  "parallel" lets v7x shard the grid
    # across its two TensorCores; constant index_maps mean w1/w2/b2 are DMA'd
    # once and stay VMEM-resident across grid steps.
    grid = (pl.cdiv(B, block_b),)
    return pl.pallas_call(
        head_kernel,
        out_shape=out_shape,
        grid_spec=pltpu.PrefetchScalarGridSpec(
            num_scalar_prefetch=0,
            grid=grid,
            in_specs=[
                pl.BlockSpec((block_b, C, HW), lambda i: (i, 0, 0)),   # x tile
                pl.BlockSpec((1, C, 1), lambda i: (0, 0, 0)),          # w1 resident
                pl.BlockSpec(memory_space=pltpu.MemorySpace.SMEM),     # b1 scalar
                pl.BlockSpec((HW, O), lambda i: (0, 0)),               # w2 resident
                pl.BlockSpec((1, O), lambda i: (0, 0)),                # b2 resident
            ],
            out_specs=pl.BlockSpec((block_b, O), lambda i: (i, 0)),
        ),
        compiler_params=pltpu.CompilerParams(
            dimension_semantics=("parallel",),
            vmem_limit_bytes=vmem_limit_bytes,
        ),
    )(x, w1, b1, w2, b2)


if __name__ == "__main__":
    key = jax.random.PRNGKey(0)
    kx, kw1, kb1, kw2, kb2, kx2 = jax.random.split(key, 6)

    # Small deterministic setup (module-default in_channels=1408 shrunk to 128;
    # spatial is 10x10 because the fc expects 100 flattened features).
    C, H, W = 128, 10, 10
    out_count = 8
    O = out_count * 2
    HW = H * W

    conv_w = jax.random.normal(kw1, (1, C, 1, 1), jnp.float32) * 0.05
    conv_b = jax.random.normal(kb1, (1,), jnp.float32) * 0.05
    fc_w = jax.random.normal(kw2, (O, HW), jnp.float32) * 0.05
    fc_b = jax.random.normal(kb2, (O,), jnp.float32) * 0.05
    params = prepare_params(conv_w, conv_b, fc_w, fc_b)   # one-time, off hot path

    def reference(x_nchw):
        conv = jnp.einsum('bchw,c->bhw', x_nchw, conv_w[0, :, 0, 0]) + conv_b[0]
        h = jnp.maximum(conv, 0.0).reshape(x_nchw.shape[0], HW)
        return h @ fc_w.T + fc_b

    # 1) Toy batch -> grid-less path.
    x_small = jax.random.normal(kx, (2, C, H, W), jnp.float32)
    out_small = jax.block_until_ready(jigsaw_head(x_small, params))
    assert out_small.shape == (2, O)
    assert jnp.allclose(out_small, reference(x_small), atol=1e-3, rtol=1e-3), \
        "small-batch mismatch vs reference"

    # 2) Larger batch -> gridded, batch-parallel path (Bt=8 -> grid=(2,)).
    x_big = jax.random.normal(kx2, (16, C, H, W), jnp.float32)
    out_big = jax.block_until_ready(jigsaw_head(x_big, params, block_b=8))
    assert out_big.shape == (16, O)
    assert jnp.allclose(out_big, reference(x_big), atol=1e-3, rtol=1e-3), \
        "gridded-batch mismatch vs reference"

    print("KERNEL_OK")
</pallas_src>

<mosaic_0001>
module attributes {stable_mosaic.version = 11 : i64} {
  func.func @head_kernel(%arg0: memref<2x128x100xf32, #tpu.memory_space<vmem>>, %arg1: memref<1x128x1xf32, #tpu.memory_space<vmem>>, %arg2: memref<1x1xf32, #tpu.memory_space<smem>>, %arg3: memref<100x16xf32, #tpu.memory_space<vmem>>, %arg4: memref<1x16xf32, #tpu.memory_space<vmem>>, %arg5: memref<2x16xf32, #tpu.memory_space<vmem>>) attributes {dimension_semantics = [], scalar_prefetch = 0 : i64, scratch_operands = 0 : i64, tpu.core_type = #tpu.core_type<tc>} {
    %c0 = arith.constant 0 : index
    %c0_0 = arith.constant 0 : index
    %c0_1 = arith.constant 0 : index
    %0 = vector.load %arg0[%c0, %c0_0, %c0_1] : memref<2x128x100xf32, #tpu.memory_space<vmem>>, vector<2x128x100xf32>
    %c0_2 = arith.constant 0 : index
    %c0_3 = arith.constant 0 : index
    %c0_4 = arith.constant 0 : index
    %1 = vector.load %arg1[%c0_2, %c0_3, %c0_4] : memref<1x128x1xf32, #tpu.memory_space<vmem>>, vector<1x128x1xf32>
    %c0_5 = arith.constant 0 : index
    %c0_6 = arith.constant 0 : index
    %2 = memref.load %arg2[%c0_5, %c0_6] : memref<1x1xf32, #tpu.memory_space<smem>>
    %3 = vector.broadcast %1 : vector<1x128x1xf32> to vector<2x128x100xf32>
    %4 = arith.mulf %0, %3 : vector<2x128x100xf32>
    %cst = arith.constant dense<0.000000e+00> : vector<2x100xf32>
    %5 = vector.multi_reduction <add>, %4, %cst [1] : vector<2x128x100xf32> to vector<2x100xf32>
    %6 = vector.broadcast %2 : f32 to vector<2x100xf32>
    %7 = arith.addf %5, %6 : vector<2x100xf32>
    %cst_7 = arith.constant 0.000000e+00 : f32
    %8 = vector.broadcast %cst_7 : f32 to vector<2x100xf32>
    %9 = arith.maximumf %7, %8 : vector<2x100xf32>
    %c0_8 = arith.constant 0 : index
    %c0_9 = arith.constant 0 : index
    %10 = vector.load %arg3[%c0_8, %c0_9] : memref<100x16xf32, #tpu.memory_space<vmem>>, vector<100x16xf32>
    %cst_10 = arith.constant dense<0.000000e+00> : vector<2x16xf32>
    %11 = tpu.matmul %9, %10, %cst_10 {dimension_numbers = #tpu.dot_dimension_numbers<[1], [0], [0], [1], [0, 0, 1, 1], [], []>} : vector<2x100xf32>, vector<100x16xf32>, vector<2x16xf32> -> vector<2x16xf32>
    %c0_11 = arith.constant 0 : index
    %c0_12 = arith.constant 0 : index
    %12 = vector.load %arg4[%c0_11, %c0_12] : memref<1x16xf32, #tpu.memory_space<vmem>>, vector<1x16xf32>
    %13 = vector.broadcast %12 : vector<1x16xf32> to vector<2x16xf32>
    %14 = arith.addf %11, %13 : vector<2x16xf32>
    %c0_13 = arith.constant 0 : index
    %c0_14 = arith.constant 0 : index
    %15 = vector.load %arg5[%c0_13, %c0_14] : memref<2x16xf32, #tpu.memory_space<vmem>>, vector<2x16xf32>
    tpu.vector_store %arg5[%c0_13, %c0_14], %14 {strides = array<i32>} : memref<2x16xf32, #tpu.memory_space<vmem>>, vector<2x16xf32>,
    return
  }
}

</mosaic_0001>

<llo_original>
// kernel: tpu_custom_call.1
$region0: #{tpu_custom_call.1}
  #allocation0 [shape = 'u32[]', space=smem, size = 0x4, offset = 0x4, fixed_abs, tag = 'smem constant byte address 0x4 - core index']
  #allocation1 [shape = 'u32[144,128]{1,0:T(1,128)}', space=vmem, size = 0x12000, scoped, tag = 'internal scratch']
  #allocation2 [shape = 'f32[1,1]{1,0:T(1,128)S(6)}', space=smem, size = 0x200, scoped, tag = 'scoped memory for tpu_custom_call.1']
  %s0 = inlined_call_operand.vmem [shape: f32[2,128,100], index: 0, kind: input, shape index: {}]
  %s1 = inlined_call_operand.vmem [shape: f32[1,128,1], index: 1, kind: input, shape index: {}]
  %s2 = inlined_call_operand.<no memory space> [shape: f32[1,1], index: 2, kind: input, shape index: {}]
  %s3 = inlined_call_operand.vmem [shape: f32[100,16], index: 3, kind: input, shape index: {}]
  %s4 = inlined_call_operand.vmem [shape: f32[1,16], index: 4, kind: input, shape index: {}]
  %s5 = inlined_call_operand.hbm [shape: f32[2,16], index: 5, kind: output, shape index: {}]
  %s6 = sld [smem:[#allocation0]]
  $region30: #{tpu_custom_call.1} parent=0
    _
  %s8 = ssub.s32 1, %s6
  %s9 = scalar_select 0, %s8, %s6
  %10 = sst [smem:[#allocation2]] %s2
  $region1: #{tpu_custom_call.1} parent=0
    #allocation3 [shape = 'u8[1024]{0}', space=vmem, size = 0x400, scoped, tag = 'output window, operand 0, single buffered']
    #allocation4 [shape = 's32[1]{0}', space=sflag, size = 0x4, scoped, tag = 'scoped memory for tpu_custom_call.1']
    %11 = vsyncpa [#allocation4], 0
    // Predicated region
    $region2: #{tpu_custom_call.1} parent=1 // pred_check
      _
    $region3: #{tpu_custom_call.1} parent=1 // pred_check_branch
      %13 = sbr.rel (0) target = $region5
    $region4: #{tpu_custom_call.1} parent=1 // pred_region
      _
    $region5: #{tpu_custom_call.1} parent=1 // pred_fallthru
      _
    // Predicated region
    $region6: #{tpu_custom_call.1} parent=1 // pred_check
      _
    $region7: #{tpu_custom_call.1} parent=1 // pred_check_branch
      %15 = sbr.rel (0) target = $region9
    $region8: #{tpu_custom_call.1} parent=1 // pred_region
      _
    $region9: #{tpu_custom_call.1} parent=1 // pred_fallthru
      _
    // Predicated region
    $region10: #{tpu_custom_call.1} parent=1 // pred_check
      _
    $region11: #{tpu_custom_call.1} parent=1 // pred_check_branch
      %17 = sbr.rel (0) target = $region13
    $region12: #{tpu_custom_call.1} parent=1 // pred_region
      _
    $region13: #{tpu_custom_call.1} parent=1 // pred_fallthru
      _
    // Predicated region
    $region14: #{tpu_custom_call.1} parent=1 // pred_check
      _
    $region15: #{tpu_custom_call.1} parent=1 // pred_check_branch
      %19 = sbr.rel (0) target = $region17
    $region16: #{tpu_custom_call.1} parent=1 // pred_region
      _
    $region17: #{tpu_custom_call.1} parent=1 // pred_fallthru
      _
    // Predicated region
    $region18: #{tpu_custom_call.1} parent=1 // pred_check
      _
    $region19: #{tpu_custom_call.1} parent=1 // pred_check_branch
      %21 = sbr.rel (0) target = $region21
    $region20: #{tpu_custom_call.1} parent=1 // pred_region
      _
    $region21: #{tpu_custom_call.1} parent=1 // pred_fallthru
      _
    %v22 = vld [vmem:[%s0] sm:$0xff]
    %v23 = vld [vmem:[%s0 + $0x8] sm:$0xff]
    %v24 = vld [vmem:[%s0 + $0x10] sm:$0xff]
    %v25 = vld [vmem:[%s0 + $0x18] sm:$0xff]
    %v26 = vld [vmem:[%s0 + $0x20] sm:$0xff]
    %v27 = vld [vmem:[%s0 + $0x28] sm:$0xff]
    %v28 = vld [vmem:[%s0 + $0x30] sm:$0xff]
    %v29 = vld [vmem:[%s0 + $0x38] sm:$0xff]
    %v30 = vld [vmem:[%s0 + $0x40] sm:$0xff]
    %v31 = vld [vmem:[%s0 + $0x48] sm:$0xff]
    %v32 = vld [vmem:[%s0 + $0x50] sm:$0xff]
    %v33 = vld [vmem:[%s0 + $0x58] sm:$0xff]
    %v34 = vld [vmem:[%s0 + $0x60] sm:$0xff]
    %v35 = vld [vmem:[%s0 + $0x68] sm:$0xff]
    %v36 = vld [vmem:[%s0 + $0x70] sm:$0xff]
    %v37 = vld [vmem:[%s0 + $0x78] sm:$0xff]
    %v38 = vld [vmem:[%s0 + $0x80] sm:$0xff]
    %v39 = vld [vmem:[%s0 + $0x88] sm:$0xff]
    %v40 = vld [vmem:[%s0 + $0x90] sm:$0xff]
    %v41 = vld [vmem:[%s0 + $0x98] sm:$0xff]
    %v42 = vld [vmem:[%s0 + $0xa0] sm:$0xff]
    %v43 = vld [vmem:[%s0 + $0xa8] sm:$0xff]
    %v44 = vld [vmem:[%s0 + $0xb0] sm:$0xff]
    %v45 = vld [vmem:[%s0 + $0xb8] sm:$0xff]
    %v46 = vld [vmem:[%s0 + $0xc0] sm:$0xff]
    %v47 = vld [vmem:[%s0 + $0xc8] sm:$0xff]
    %v48 = vld [vmem:[%s0 + $0xd0] sm:$0xff]
    %v49 = vld [vmem:[%s0 + $0xd8] sm:$0xff]
    %v50 = vld [vmem:[%s0 + $0xe0] sm:$0xff]
    %v51 = vld [vmem:[%s0 + $0xe8] sm:$0xff]
    %v52 = vld [vmem:[%s0 + $0xf0] sm:$0xff]
    %v53 = vld [vmem:[%s0 + $0xf8] sm:$0xff]
    %v54 = vld [vmem:[%s1] sm:$0xff]
    %v55 = vld [vmem:[%s1 + $0x8] sm:$0xff]
    %v56 = vld [vmem:[%s1 + $0x10] sm:$0xff]
    %v57 = vld [vmem:[%s1 + $0x18] sm:$0xff]
    %v58 = vld [vmem:[%s1 + $0x20] sm:$0xff]
    %v59 = vld [vmem:[%s1 + $0x28] sm:$0xff]
    %v60 = vld [vmem:[%s1 + $0x30] sm:$0xff]
    %v61 = vld [vmem:[%s1 + $0x38] sm:$0xff]
    %v62 = vld [vmem:[%s1 + $0x40] sm:$0xff]
    %v63 = vld [vmem:[%s1 + $0x48] sm:$0xff]
    %v64 = vld [vmem:[%s1 + $0x50] sm:$0xff]
    %v65 = vld [vmem:[%s1 + $0x58] sm:$0xff]
    %v66 = vld [vmem:[%s1 + $0x60] sm:$0xff]
    %v67 = vld [vmem:[%s1 + $0x68] sm:$0xff]
    %v68 = vld [vmem:[%s1 + $0x70] sm:$0xff]
    %v69 = vld [vmem:[%s1 + $0x78] sm:$0xff]
    %s70 = sld [smem:[#allocation2]]
    %72 = vset.pattern.permute.xlu0 0
    %73 = vperm.xlu0 %72, %v54
    %v74 = vpop.permute.xlu0 %73
    %77 = vset.pattern.permute.xlu0 0
    %78 = vperm.xlu0 %77, %v55
    %v79 = vpop.permute.xlu0 %78
    %82 = vset.pattern.permute.xlu0 0
    %83 = vperm.xlu0 %82, %v56
    %v84 = vpop.permute.xlu0 %83
    %87 = vset.pattern.permute.xlu0 0
    %88 = vperm.xlu0 %87, %v57
    %v89 = vpop.permute.xlu0 %88
    %92 = vset.pattern.permute.xlu0 0
    %93 = vperm.xlu0 %92, %v58
    %v94 = vpop.permute.xlu0 %93
    %97 = vset.pattern.permute.xlu0 0
    %98 = vperm.xlu0 %97, %v59
    %v99 = vpop.permute.xlu0 %98
    %102 = vset.pattern.permute.xlu0 0
    %103 = vperm.xlu0 %102, %v60
    %v104 = vpop.permute.xlu0 %103
    %107 = vset.pattern.permute.xlu0 0
    %108 = vperm.xlu0 %107, %v61
    %v109 = vpop.permute.xlu0 %108
    %112 = vset.pattern.permute.xlu0 0
    %113 = vperm.xlu0 %112, %v62
    %v114 = vpop.permute.xlu0 %113
    %117 = vset.pattern.permute.xlu0 0
    %118 = vperm.xlu0 %117, %v63
    %v119 = vpop.permute.xlu0 %118
    %122 = vset.pattern.permute.xlu0 0
    %123 = vperm.xlu0 %122, %v64
    %v124 = vpop.permute.xlu0 %123
    %127 = vset.pattern.permute.xlu0 0
    %128 = vperm.xlu0 %127, %v65
    %v129 = vpop.permute.xlu0 %128
    %132 = vset.pattern.permute.xlu0 0
    %133 = vperm.xlu0 %132, %v66
    %v134 = vpop.permute.xlu0 %133
    %137 = vset.pattern.permute.xlu0 0
    %138 = vperm.xlu0 %137, %v67
    %v139 = vpop.permute.xlu0 %138
    %142 = vset.pattern.permute.xlu0 0
    %143 = vperm.xlu0 %142, %v68
    %v144 = vpop.permute.xlu0 %143
    %147 = vset.pattern.permute.xlu0 0
    %148 = vperm.xlu0 %147, %v69
    %v149 = vpop.permute.xlu0 %148
    %v151 = vmul.f32 %v22, %v74
    %v152 = vmul.f32 %v23, %v79
    %v153 = vmul.f32 %v24, %v84
    %v154 = vmul.f32 %v25, %v89
    %v155 = vmul.f32 %v26, %v94
    %v156 = vmul.f32 %v27, %v99
    %v157 = vmul.f32 %v28, %v104
    %v158 = vmul.f32 %v29, %v109
    %v159 = vmul.f32 %v30, %v114
    %v160 = vmul.f32 %v31, %v119
    %v161 = vmul.f32 %v32, %v124
    %v162 = vmul.f32 %v33, %v129
    %v163 = vmul.f32 %v34, %v134
    %v164 = vmul.f32 %v35, %v139
    %v165 = vmul.f32 %v36, %v144
    %v166 = vmul.f32 %v37, %v149
    %v167 = vmul.f32 %v38, %v74
    %v168 = vmul.f32 %v39, %v79
    %v169 = vmul.f32 %v40, %v84
    %v170 = vmul.f32 %v41, %v89
    %v171 = vmul.f32 %v42, %v94
    %v172 = vmul.f32 %v43, %v99
    %v173 = vmul.f32 %v44, %v104
    %v174 = vmul.f32 %v45, %v109
    %v175 = vmul.f32 %v46, %v114
    %v176 = vmul.f32 %v47, %v119
    %v177 = vmul.f32 %v48, %v124
    %v178 = vmul.f32 %v49, %v129
    %v179 = vmul.f32 %v50, %v134
    %v180 = vmul.f32 %v51, %v139
    %v181 = vmul.f32 %v52, %v144
    %v182 = vmul.f32 %v53, %v149
    %vm183 = vcmask 818176
    %v184 = vsel %vm183, %v151, 0.0
    %v185 = vsel %vm183, %v152, 0.0
    %v186 = vadd.f32 %v184, %v185
    %v187 = vsel %vm183, %v153, 0.0
    %v188 = vadd.f32 %v186, %v187
    %v189 = vsel %vm183, %v154, 0.0
    %v190 = vadd.f32 %v188, %v189
    %v191 = vsel %vm183, %v155, 0.0
    %v192 = vadd.f32 %v190, %v191
    %v193 = vsel %vm183, %v156, 0.0
    %v194 = vadd.f32 %v192, %v193
    %v195 = vsel %vm183, %v157, 0.0
    %v196 = vadd.f32 %v194, %v195
    %v197 = vsel %vm183, %v158, 0.0
    %v198 = vadd.f32 %v196, %v197
    %v199 = vsel %vm183, %v159, 0.0
    %v200 = vadd.f32 %v198, %v199
    %v201 = vsel %vm183, %v160, 0.0
    %v202 = vadd.f32 %v200, %v201
    %v203 = vsel %vm183, %v161, 0.0
    %v204 = vadd.f32 %v202, %v203
    %v205 = vsel %vm183, %v162, 0.0
    %v206 = vadd.f32 %v204, %v205
    %v207 = vsel %vm183, %v163, 0.0
    %v208 = vadd.f32 %v206, %v207
    %v209 = vsel %vm183, %v164, 0.0
    %v210 = vadd.f32 %v208, %v209
    %v211 = vsel %vm183, %v165, 0.0
    %v212 = vadd.f32 %v210, %v211
    %v213 = vsel %vm183, %v166, 0.0
    %v214 = vadd.f32 %v212, %v213
    %v215 = vrot.slane %v214, 4
    %v216 = vadd.f32 %v214, %v215
    %v217 = vrot.slane %v216, 2
    %v218 = vadd.f32 %v216, %v217
    %v219 = vrot.slane %v218, 1
    %v220 = vadd.f32 %v218, %v219
    %v221 = vsel %vm183, %v167, 0.0
    %v222 = vsel %vm183, %v168, 0.0
    %v223 = vadd.f32 %v221, %v222
    %v224 = vsel %vm183, %v169, 0.0
    %v225 = vadd.f32 %v223, %v224
    %v226 = vsel %vm183, %v170, 0.0
    %v227 = vadd.f32 %v225, %v226
    %v228 = vsel %vm183, %v171, 0.0
    %v229 = vadd.f32 %v227, %v228
    %v230 = vsel %vm183, %v172, 0.0
    %v231 = vadd.f32 %v229, %v230
    %v232 = vsel %vm183, %v173, 0.0
    %v233 = vadd.f32 %v231, %v232
    %v234 = vsel %vm183, %v174, 0.0
    %v235 = vadd.f32 %v233, %v234
    %v236 = vsel %vm183, %v175, 0.0
    %v237 = vadd.f32 %v235, %v236
    %v238 = vsel %vm183, %v176, 0.0
    %v239 = vadd.f32 %v237, %v238
    %v240 = vsel %vm183, %v177, 0.0
    %v241 = vadd.f32 %v239, %v240
    %v242 = vsel %vm183, %v178, 0.0
    %v243 = vadd.f32 %v241, %v242
    %v244 = vsel %vm183, %v179, 0.0
    %v245 = vadd.f32 %v243, %v244
    %v246 = vsel %vm183, %v180, 0.0
    %v247 = vadd.f32 %v245, %v246
    %v248 = vsel %vm183, %v181, 0.0
    %v249 = vadd.f32 %v247, %v248
    %v250 = vsel %vm183, %v182, 0.0
    %v251 = vadd.f32 %v249, %v250
    %v252 = vrot.slane %v251, 4
    %v253 = vadd.f32 %v251, %v252
    %v254 = vrot.slane %v253, 2
    %v255 = vadd.f32 %v253, %v254
    %v256 = vrot.slane %v255, 1
    %v257 = vadd.f32 %v255, %v256
    %v258 = vstv %s70
    %v259 = vadd.f32 %v220, %v258
    %v260 = vadd.f32 %v257, %v258
    %v261 = vmax.f32 %v259, 0.0
    %v262 = vmax.f32 %v260, 0.0
    %v263 = vld [vmem:[%s3] sm:$0xff]
    %v264 = vld [vmem:[%s3 + $0x8] sm:$0xff]
    %v265 = vld [vmem:[%s3 + $0x10] sm:$0xff]
    %v266 = vld [vmem:[%s3 + $0x18] sm:$0xff]
    %v267 = vld [vmem:[%s3 + $0x20] sm:$0xff]
    %v268 = vld [vmem:[%s3 + $0x28] sm:$0xff]
    %v269 = vld [vmem:[%s3 + $0x30] sm:$0xff]
    %v270 = vld [vmem:[%s3 + $0x38] sm:$0xff]
    %v271 = vld [vmem:[%s3 + $0x40] sm:$0xff]
    %v272 = vld [vmem:[%s3 + $0x48] sm:$0xff]
    %v273 = vld [vmem:[%s3 + $0x50] sm:$0xff]
    %v274 = vld [vmem:[%s3 + $0x58] sm:$0xff]
    %v275 = vld [vmem:[%s3 + $0x60] sm:$0xf]
    %v276 = vld [vmem:[%s4] sm:$0x1]
    %v278 = vlaneseq
    %v279 = vshrl.u32 %v278, 7
    %v280 = vsub.s32 0, %v279
    %v281 = vrot.slane %v276, %v280
    %vm285 = vcmask 1041409
    %v286 = vsel %vm285, %v262, %v261
    %v287 = vsel %vm183, %v286, 0
    %vm289 = vcmask 1043456
    %v291 = vsel %vm289, %v275, 0
    %293 = vmatprep.subr.mxu0 0.0
    %294 = vmatpush1.msra.mxu0 %v263
    %295 = vmatprep.subr.mxu0 0.0
    %296 = vmatpush1.msra.mxu0 %v264
    %297 = vmatprep.subr.mxu0 0.0
    %298 = vmatpush1.msra.mxu0 %v265
    %299 = vmatprep.subr.mxu0 0.0
    %300 = vmatpush1.msra.mxu0 %v266
    %301 = vmatprep.subr.mxu0 0.0
    %302 = vmatpush1.msra.mxu0 %v267
    %303 = vmatprep.subr.mxu0 0.0
    %304 = vmatpush1.msra.mxu0 %v268
    %305 = vmatprep.subr.mxu0 0.0
    %306 = vmatpush1.msra.mxu0 %v269
    %307 = vmatprep.subr.mxu0 0.0
    %308 = vmatpush1.msra.mxu0 %v270
    %309 = vmatprep.subr.mxu0 0.0
    %310 = vmatpush1.msra.mxu0 %v271
    %311 = vmatprep.subr.mxu0 0.0
    %312 = vmatpush1.msra.mxu0 %v272
    %313 = vmatprep.subr.mxu0 0.0
    %314 = vmatpush1.msra.mxu0 %v273
    %315 = vmatprep.subr.mxu0 0.0
    %316 = vmatpush1.msra.mxu0 %v274
    %317 = vmatprep.subr.mxu0 0.0
    %318 = vmatpush1.msra.mxu0 %v291
    %319 = vmatprep.subr.mxu0 0.0
    %320 = vmatpush1.msra.mxu0 0.0
    %321 = vmatprep.subr.mxu0 0.0
    %322 = vmatpush1.msra.mxu0 0.0
    %323 = vmatprep.subr.mxu0 0.0
    %324 = vmatpush1.msra.mxu0 0.0
    %325 = vmatprep.subr.mxu0 0.0
    %326 = vmatpush1.msra.mxu0 0.0
    %327 = vmatprep.subr.mxu0 0.0
    %328 = vmatpush1.msra.mxu0 0.0
    %329 = vmatprep.subr.mxu0 0.0
    %330 = vmatpush1.msra.mxu0 0.0
    %331 = vmatprep.subr.mxu0 0.0
    %332 = vmatpush1.msra.mxu0 0.0
    %333 = vmatprep.subr.mxu0 0.0
    %334 = vmatpush1.msra.mxu0 0.0
    %335 = vmatprep.subr.mxu0 0.0
    %336 = vmatpush1.msra.mxu0 0.0
    %337 = vmatprep.subr.mxu0 0.0
    %338 = vmatpush1.msra.mxu0 0.0
    %339 = vmatprep.subr.mxu0 0.0
    %340 = vmatpush1.msra.mxu0 0.0
    %341 = vmatprep.subr.mxu0 0.0
    %342 = vmatpush1.msra.mxu0 0.0
    %343 = vmatprep.subr.mxu0 0.0
    %344 = vmatpush1.msra.mxu0 0.0
    %345 = vmatprep.subr.mxu0 0.0
    %346 = vmatpush1.msra.mxu0 0.0
    %347 = vmatprep.subr.mxu0 0.0
    %348 = vmatpush1.msra.mxu0 0.0
    %349 = vmatprep.subr.mxu0 0.0
    %350 = vmatpush1.msra.mxu0 0.0
    %351 = vmatprep.subr.mxu0 0.0
    %352 = vmatpush1.msra.mxu0 0.0
    %353 = vmatprep.subr.mxu0 0.0
    %354 = vmatpush1.msra.mxu0 0.0
    %355 = vmatprep.subr.mxu0 0.0
    %356 = vmatpush1.msra.mxu0 0.0
    %357 = vmatprep.mubr.f32.mxu0 0.0
    %358 = vmatmul.mubr.f32.gmra.mrb[0].mxu0 %v287
    %v359 = vpop.f32.mrb[0].mxu0
    %v360 = vadd.f32 %v281, %v359
    %v361 = vpop.f32.mrb[0].mxu0
    %362 = vdwg.mxu0
    %vm363 = vcmask 123904
    %364 = vst.msk [vmem:[#allocation3] sm:$0x3] %vm363, %v360
    // Predicated region
    $region22: #{tpu_custom_call.1} parent=1 // pred_check
      _
    $region23: #{tpu_custom_call.1} parent=1 // pred_check_branch
      %366 = sbr.rel (0) target = $region25
    $region24: #{tpu_custom_call.1} parent=1 // pred_region
      %s368 = ssub.s32 32, 32
      %369 = vsyncadd [#allocation4], %s368
      %s371 = sshll.u32 [#allocation3], 4
      %s372 = int_to_ptr.vmem [resolvable:$true] %s371
      %374 = dma.vmem_to_hbm [thread:$0]  %s372, 32, %s5, [#allocation4]
    $region25: #{tpu_custom_call.1} parent=1 // pred_fallthru
      _
    // Predicated region
    $region26: #{tpu_custom_call.1} parent=1 // pred_check
      _
    $region27: #{tpu_custom_call.1} parent=1 // pred_check_branch
      %376 = sbr.rel (0) target = $region29
    $region28: #{tpu_custom_call.1} parent=1 // pred_region
      %377 = dma.done [#allocation4], 32
    $region29: #{tpu_custom_call.1} parent=1 // pred_fallthru
      _
    %378 = vsyncpa [#allocation4], 1

</llo_original>
